<compile_context>
chip_gen: v6e
topology: v6e:2x2x1
jax: 0.10.0
libtpu: 0.0.40
codegen_flags: <defaults>
</compile_context>

<pallas_src>
import functools
import math

import jax
import jax.numpy as jnp
from jax import lax
from jax.experimental import pallas as pl
from jax.experimental.pallas import tpu as pltpu


LN_EPS = 1e-5  # torch.nn.LayerNorm default


def _round_up(x, m):
    return ((x + m - 1) // m) * m


def _layernorm_onepass(x, gamma, beta):
    # var = E[x^2] - E[x]^2 : one fewer full elementwise pass than the
    # two-pass form; guarded against tiny negative variance.
    mu = jnp.mean(x, axis=-1, keepdims=True)
    ms = jnp.mean(x * x, axis=-1, keepdims=True)
    var = jnp.maximum(ms - mu * mu, 0.0)
    inv = lax.rsqrt(var + LN_EPS)
    return (x - mu) * inv * gamma + beta


def _gelu_exact(x):
    # torch.nn.GELU() default: exact erf-based GELU.
    return 0.5 * x * (1.0 + lax.erf(x * (1.0 / math.sqrt(2.0))))


def _gelu_tanh(x):
    # tanh approximation: the transcendental runs on the EUP slot instead of a
    # ~20-30-op VALU erf polynomial. Opt-in (numerics differ slightly).
    c = 0.7978845608028654  # sqrt(2/pi)
    return 0.5 * x * (1.0 + jnp.tanh(c * (x + 0.044715 * x * x * x)))


def actor_kernel(obs_ref, w1_ref, vec_ref, w2_ref, wh_ref, out_ref, *,
                 act_dim, approx_gelu):
    hidden = w1_ref.shape[1]
    head_pad = wh_ref.shape[1]
    gelu = _gelu_tanh if approx_gelu else _gelu_exact

    x = obs_ref[...]

    # Backbone layer 1: Linear -> LayerNorm -> GELU
    h = jnp.dot(x, w1_ref[...], preferred_element_type=jnp.float32)
    h = h + vec_ref[0:1, 0:hidden]
    h = _layernorm_onepass(h, vec_ref[1:2, 0:hidden], vec_ref[2:3, 0:hidden])
    h = gelu(h)

    # Backbone layer 2: Linear -> LayerNorm -> GELU
    h = jnp.dot(h, w2_ref[...], preferred_element_type=jnp.float32)
    h = h + vec_ref[3:4, 0:hidden]
    h = _layernorm_onepass(h, vec_ref[4:5, 0:hidden], vec_ref[5:6, 0:hidden])
    h = gelu(h)

    # Fused heads: one MXU push, one lane-dense (multiple-of-128) store.
    # Columns [0, act_dim) = mean, [act_dim, 2*act_dim) = log_std (clamped),
    # remaining columns are zero padding (sliced off in the wrapper).
    heads = jnp.dot(h, wh_ref[...], preferred_element_type=jnp.float32)
    heads = heads + vec_ref[6:7, 0:head_pad]
    col = lax.broadcasted_iota(jnp.int32, heads.shape, 1)
    out_ref[...] = jnp.where(col < act_dim, heads, jnp.clip(heads, -20.0, 2.0))


def prepare_params(params):
    """One-time conversion of PyTorch-convention params into kernel layout.

    Off the hot path: transposes, lane padding and slab packing happen once.
    """
    w1t = jnp.asarray(params["w1"].T, jnp.float32)     # (obs_dim, hidden)
    w2t = jnp.asarray(params["w2"].T, jnp.float32)     # (hidden, hidden)
    hidden = w1t.shape[1]
    act_dim = params["wm"].shape[0]
    two_act = 2 * act_dim

    # Pad the fused head width to a lane-dense multiple of 128 (>= 128).
    head_pad = max(128, _round_up(two_act, 128))
    wh = jnp.concatenate([params["wm"].T, params["ws"].T], axis=1)
    wh = jnp.pad(wh.astype(jnp.float32), ((0, 0), (0, head_pad - two_act)))

    # All small vectors packed into ONE (8, vec_width) slab:
    # rows = [b1, ln1_g, ln1_b, b2, ln2_g, ln2_b, head_bias, 0].
    vec_width = _round_up(max(hidden, head_pad), 128)

    def row(v):
        v = jnp.asarray(v, jnp.float32)
        return jnp.pad(v, (0, vec_width - v.shape[0]))

    bh = jnp.concatenate([params["bm"], params["bs"]], axis=0)
    vecs = jnp.stack(
        [row(params["b1"]), row(params["g1"]), row(params["be1"]),
         row(params["b2"]), row(params["g2"]), row(params["be2"]),
         row(bh), jnp.zeros((vec_width,), jnp.float32)], axis=0)

    return {"w1t": w1t, "vecs": vecs, "w2t": w2t, "w_heads": wh}


@functools.partial(jax.jit, static_argnames=("act_dim", "tile_b", "approx_gelu"))
def actor_forward(obs, packed, *, act_dim, tile_b=1024, approx_gelu=False):
    """obs: (B, obs_dim) float32. packed: output of prepare_params()."""
    B, obs_dim = obs.shape
    hidden = packed["w1t"].shape[1]
    head_pad = packed["w_heads"].shape[1]
    vec_width = packed["vecs"].shape[1]

    # Batch tiling: cap the tile at ceil(B/2) (rounded to 8) so the grid has
    # >= 2 steps whenever B > 8 -> megacore sharding on v7x; harmless on
    # v5e/v6e. No jnp.pad: the ragged last block is handled by Pallas's
    # partial-block masking (all ops are row-independent).
    tb = max(8, min(tile_b, _round_up(-(-B // 2), 8)))
    grid = (pl.cdiv(B, tb),)

    kernel = functools.partial(actor_kernel, act_dim=act_dim,
                               approx_gelu=approx_gelu)

    # NOTE: at hidden=128..512 everything fits easily; if hidden ever scales
    # (e.g. 4096) w2 alone is hidden^2*4 bytes -> add a K/N grid axis for w2
    # (or bf16 weights) and set vmem_limit_bytes explicitly (v7x VMEM = 64MiB).
    out = pl.pallas_call(
        kernel,
        out_shape=jax.ShapeDtypeStruct((B, head_pad), jnp.float32),
        grid_spec=pltpu.PrefetchScalarGridSpec(
            num_scalar_prefetch=0,
            grid=grid,
            in_specs=[
                pl.BlockSpec((tb, obs_dim), lambda i: (i, 0)),        # obs tile
                pl.BlockSpec((obs_dim, hidden), lambda i: (0, 0)),    # w1 (resident)
                pl.BlockSpec((8, vec_width), lambda i: (0, 0)),       # packed vectors
                pl.BlockSpec((hidden, hidden), lambda i: (0, 0)),     # w2 (resident)
                pl.BlockSpec((hidden, head_pad), lambda i: (0, 0)),   # fused head W
            ],
            out_specs=pl.BlockSpec((tb, head_pad), lambda i: (i, 0)),
        ),
        compiler_params=pltpu.CompilerParams(
            dimension_semantics=("parallel",)),
    )(obs, packed["w1t"], packed["vecs"], packed["w2t"], packed["w_heads"])

    mean = out[:, :act_dim]
    log_std = out[:, act_dim:2 * act_dim]
    return mean, log_std


def init_params(key, obs_dim, act_dim, hidden_size):
    """Deterministic synthetic init mirroring the module's parameter shapes
    (orthogonal for first backbone Linear and both heads, like the PyTorch code)."""
    ks = jax.random.split(key, 4)
    orth = jax.nn.initializers.orthogonal
    return {
        # shared_backbone[0]: Linear(obs_dim -> hidden), orthogonal gain sqrt(2)
        "w1": orth(scale=math.sqrt(2.0))(ks[0], (hidden_size, obs_dim), jnp.float32),
        "b1": jnp.zeros((hidden_size,), jnp.float32),
        # shared_backbone[1]: LayerNorm(hidden)
        "g1": jnp.ones((hidden_size,), jnp.float32),
        "be1": jnp.zeros((hidden_size,), jnp.float32),
        # shared_backbone[3]: Linear(hidden -> hidden)
        "w2": jax.random.uniform(
            ks[1], (hidden_size, hidden_size), jnp.float32,
            minval=-1.0 / math.sqrt(hidden_size), maxval=1.0 / math.sqrt(hidden_size)),
        "b2": jnp.zeros((hidden_size,), jnp.float32),
        # shared_backbone[4]: LayerNorm(hidden)
        "g2": jnp.ones((hidden_size,), jnp.float32),
        "be2": jnp.zeros((hidden_size,), jnp.float32),
        # mean_head / log_std_head: Linear(hidden -> act_dim), orthogonal gain 0.01
        "wm": orth(scale=0.01)(ks[2], (act_dim, hidden_size), jnp.float32),
        "bm": jnp.zeros((act_dim,), jnp.float32),
        "ws": orth(scale=0.01)(ks[3], (act_dim, hidden_size), jnp.float32),
        "bs": jnp.zeros((act_dim,), jnp.float32),
    }


def reference_forward(obs, params, approx_gelu=False):
    """Pure-JAX reference (PyTorch-convention weights, two-pass LayerNorm)."""
    gelu = _gelu_tanh if approx_gelu else _gelu_exact

    def ln(x, g, b):
        mu = jnp.mean(x, axis=-1, keepdims=True)
        var = jnp.mean((x - mu) ** 2, axis=-1, keepdims=True)
        return (x - mu) * lax.rsqrt(var + LN_EPS) * g + b

    h = obs @ params["w1"].T + params["b1"]
    h = gelu(ln(h, params["g1"], params["be1"]))
    h = h @ params["w2"].T + params["b2"]
    h = gelu(ln(h, params["g2"], params["be2"]))
    mean = h @ params["wm"].T + params["bm"]
    log_std = jnp.clip(h @ params["ws"].T + params["bs"], -20.0, 2.0)
    return mean, log_std


if __name__ == "__main__":
    B, OBS_DIM, ACT_DIM, HIDDEN = 8, 32, 8, 128

    key = jax.random.PRNGKey(0)
    k_obs, k_params = jax.random.split(key)
    obs = jax.random.normal(k_obs, (B, OBS_DIM), dtype=jnp.float32)
    params = init_params(k_params, OBS_DIM, ACT_DIM, HIDDEN)

    packed = prepare_params(params)  # one-time parameter conversion (off hot path)

    # Exact-GELU path (matches nn.GELU() / the PyTorch module).
    mean, log_std = actor_forward(obs, packed, act_dim=ACT_DIM)
    jax.block_until_ready((mean, log_std))
    ref_mean, ref_log_std = reference_forward(obs, params)
    assert mean.shape == (B, ACT_DIM) and log_std.shape == (B, ACT_DIM)
    assert jnp.allclose(mean, ref_mean, atol=1e-5, rtol=1e-5)
    assert jnp.allclose(log_std, ref_log_std, atol=1e-5, rtol=1e-5)
    assert bool(jnp.all(log_std >= -20.0)) and bool(jnp.all(log_std <= 2.0))

    # Ragged batch: exercises the partial last block (no jnp.pad on hot path).
    B2 = 13
    obs2 = jax.random.normal(jax.random.PRNGKey(1), (B2, OBS_DIM), dtype=jnp.float32)
    mean2, log_std2 = actor_forward(obs2, packed, act_dim=ACT_DIM)
    jax.block_until_ready((mean2, log_std2))
    ref_mean2, ref_log_std2 = reference_forward(obs2, params)
    assert mean2.shape == (B2, ACT_DIM) and log_std2.shape == (B2, ACT_DIM)
    assert jnp.allclose(mean2, ref_mean2, atol=1e-5, rtol=1e-5)
    assert jnp.allclose(log_std2, ref_log_std2, atol=1e-5, rtol=1e-5)

    # Opt-in fast GELU (tanh approx on the EUP); checked against a tanh reference.
    mean3, log_std3 = actor_forward(obs, packed, act_dim=ACT_DIM, approx_gelu=True)
    jax.block_until_ready((mean3, log_std3))
    ref_mean3, ref_log_std3 = reference_forward(obs, params, approx_gelu=True)
    assert jnp.allclose(mean3, ref_mean3, atol=1e-5, rtol=1e-5)
    assert jnp.allclose(log_std3, ref_log_std3, atol=1e-5, rtol=1e-5)

    print("KERNEL_OK")
</pallas_src>

<mosaic_0001>
module attributes {stable_mosaic.version = 11 : i64} {
  func.func @actor_kernel(%arg0: i32, %arg1: memref<8x32xf32, #tpu.memory_space<vmem>>, %arg2: memref<32x128xf32, #tpu.memory_space<vmem>>, %arg3: memref<8x128xf32, #tpu.memory_space<vmem>>, %arg4: memref<128x128xf32, #tpu.memory_space<vmem>>, %arg5: memref<128x128xf32, #tpu.memory_space<vmem>>, %arg6: memref<8x128xf32, #tpu.memory_space<vmem>>) attributes {dimension_semantics = [#tpu.dimension_semantics<parallel>], iteration_bounds = array<i64: 1>, scalar_prefetch = 0 : i64, scratch_operands = 0 : i64, tpu.core_type = #tpu.core_type<tc>, window_params = [{transform_indices = @transform_0, window_bounds = array<i64: 8, 32>}, {pipeline_mode = #tpu.pipeline_mode<synchronous>, transform_indices = @transform_1, window_bounds = array<i64: 32, 128>}, {pipeline_mode = #tpu.pipeline_mode<synchronous>, transform_indices = @transform_2, window_bounds = array<i64: 8, 128>}, {pipeline_mode = #tpu.pipeline_mode<synchronous>, transform_indices = @transform_3, window_bounds = array<i64: 128, 128>}, {pipeline_mode = #tpu.pipeline_mode<synchronous>, transform_indices = @transform_4, window_bounds = array<i64: 128, 128>}, {transform_indices = @transform_5, window_bounds = array<i64: 8, 128>}]} {
    %c0 = arith.constant 0 : index
    %c0_0 = arith.constant 0 : index
    %0 = vector.load %arg1[%c0, %c0_0] : memref<8x32xf32, #tpu.memory_space<vmem>>, vector<8x32xf32>
    %c0_1 = arith.constant 0 : index
    %c0_2 = arith.constant 0 : index
    %1 = vector.load %arg2[%c0_1, %c0_2] : memref<32x128xf32, #tpu.memory_space<vmem>>, vector<32x128xf32>
    %cst = arith.constant dense<0.000000e+00> : vector<8x128xf32>
    %2 = tpu.matmul %0, %1, %cst {dimension_numbers = #tpu.dot_dimension_numbers<[1], [0], [0], [1], [0, 0, 1, 1], [], []>} : vector<8x32xf32>, vector<32x128xf32>, vector<8x128xf32> -> vector<8x128xf32>
    %c0_3 = arith.constant 0 : index
    %c0_4 = arith.constant 0 : index
    %3 = vector.load %arg3[%c0_3, %c0_4] : memref<8x128xf32, #tpu.memory_space<vmem>>, vector<1x128xf32>
    %4 = vector.broadcast %3 : vector<1x128xf32> to vector<8x128xf32>
    %5 = arith.addf %2, %4 : vector<8x128xf32>
    %c1 = arith.constant 1 : index
    %c0_5 = arith.constant 0 : index
    %6 = vector.load %arg3[%c1, %c0_5] : memref<8x128xf32, #tpu.memory_space<vmem>>, vector<1x128xf32>
    %c2 = arith.constant 2 : index
    %c0_6 = arith.constant 0 : index
    %7 = vector.load %arg3[%c2, %c0_6] : memref<8x128xf32, #tpu.memory_space<vmem>>, vector<1x128xf32>
    %cst_7 = arith.constant dense<0.000000e+00> : vector<8xf32>
    %8 = vector.multi_reduction <add>, %5, %cst_7 [1] : vector<8x128xf32> to vector<8xf32>
    %9 = vector.shape_cast %8 : vector<8xf32> to vector<8x1xf32>
    %cst_8 = arith.constant 1.280000e+02 : f32
    %10 = vector.broadcast %cst_8 : f32 to vector<8x1xf32>
    %11 = arith.divf %9, %10 : vector<8x1xf32>
    %12 = arith.mulf %5, %5 : vector<8x128xf32>
    %cst_9 = arith.constant dense<0.000000e+00> : vector<8xf32>
    %13 = vector.multi_reduction <add>, %12, %cst_9 [1] : vector<8x128xf32> to vector<8xf32>
    %14 = vector.shape_cast %13 : vector<8xf32> to vector<8x1xf32>
    %cst_10 = arith.constant 1.280000e+02 : f32
    %15 = vector.broadcast %cst_10 : f32 to vector<8x1xf32>
    %16 = arith.divf %14, %15 : vector<8x1xf32>
    %17 = arith.mulf %11, %11 : vector<8x1xf32>
    %18 = arith.subf %16, %17 : vector<8x1xf32>
    %cst_11 = arith.constant 0.000000e+00 : f32
    %19 = vector.broadcast %cst_11 : f32 to vector<8x1xf32>
    %20 = arith.maximumf %18, %19 : vector<8x1xf32>
    %cst_12 = arith.constant 9.99999974E-6 : f32
    %21 = vector.broadcast %cst_12 : f32 to vector<8x1xf32>
    %22 = arith.addf %20, %21 : vector<8x1xf32>
    %23 = math.rsqrt %22 : vector<8x1xf32>
    %24 = vector.broadcast %11 : vector<8x1xf32> to vector<8x128xf32>
    %25 = arith.subf %5, %24 : vector<8x128xf32>
    %26 = vector.broadcast %23 : vector<8x1xf32> to vector<8x128xf32>
    %27 = arith.mulf %25, %26 : vector<8x128xf32>
    %28 = vector.broadcast %6 : vector<1x128xf32> to vector<8x128xf32>
    %29 = arith.mulf %27, %28 : vector<8x128xf32>
    %30 = vector.broadcast %7 : vector<1x128xf32> to vector<8x128xf32>
    %31 = arith.addf %29, %30 : vector<8x128xf32>
    %cst_13 = arith.constant 5.000000e-01 : f32
    %32 = vector.broadcast %cst_13 : f32 to vector<8x128xf32>
    %33 = arith.mulf %32, %31 : vector<8x128xf32>
    %cst_14 = arith.constant 0.707106769 : f32
    %34 = vector.broadcast %cst_14 : f32 to vector<8x128xf32>
    %35 = arith.mulf %31, %34 : vector<8x128xf32>
    %36 = math.erf %35 : vector<8x128xf32>
    %cst_15 = arith.constant 1.000000e+00 : f32
    %37 = vector.broadcast %cst_15 : f32 to vector<8x128xf32>
    %38 = arith.addf %37, %36 : vector<8x128xf32>
    %39 = arith.mulf %33, %38 : vector<8x128xf32>
    %c0_16 = arith.constant 0 : index
    %c0_17 = arith.constant 0 : index
    %40 = vector.load %arg4[%c0_16, %c0_17] : memref<128x128xf32, #tpu.memory_space<vmem>>, vector<128x128xf32>
    %cst_18 = arith.constant dense<0.000000e+00> : vector<8x128xf32>
    %41 = tpu.matmul %39, %40, %cst_18 {dimension_numbers = #tpu.dot_dimension_numbers<[1], [0], [0], [1], [0, 0, 1, 1], [], []>} : vector<8x128xf32>, vector<128x128xf32>, vector<8x128xf32> -> vector<8x128xf32>
    %c3 = arith.constant 3 : index
    %c0_19 = arith.constant 0 : index
    %42 = vector.load %arg3[%c3, %c0_19] : memref<8x128xf32, #tpu.memory_space<vmem>>, vector<1x128xf32>
    %43 = vector.broadcast %42 : vector<1x128xf32> to vector<8x128xf32>
    %44 = arith.addf %41, %43 : vector<8x128xf32>
    %c4 = arith.constant 4 : index
    %c0_20 = arith.constant 0 : index
    %45 = vector.load %arg3[%c4, %c0_20] : memref<8x128xf32, #tpu.memory_space<vmem>>, vector<1x128xf32>
    %c5 = arith.constant 5 : index
    %c0_21 = arith.constant 0 : index
    %46 = vector.load %arg3[%c5, %c0_21] : memref<8x128xf32, #tpu.memory_space<vmem>>, vector<1x128xf32>
    %cst_22 = arith.constant dense<0.000000e+00> : vector<8xf32>
    %47 = vector.multi_reduction <add>, %44, %cst_22 [1] : vector<8x128xf32> to vector<8xf32>
    %48 = vector.shape_cast %47 : vector<8xf32> to vector<8x1xf32>
    %cst_23 = arith.constant 1.280000e+02 : f32
    %49 = vector.broadcast %cst_23 : f32 to vector<8x1xf32>
    %50 = arith.divf %48, %49 : vector<8x1xf32>
    %51 = arith.mulf %44, %44 : vector<8x128xf32>
    %cst_24 = arith.constant dense<0.000000e+00> : vector<8xf32>
    %52 = vector.multi_reduction <add>, %51, %cst_24 [1] : vector<8x128xf32> to vector<8xf32>
    %53 = vector.shape_cast %52 : vector<8xf32> to vector<8x1xf32>
    %cst_25 = arith.constant 1.280000e+02 : f32
    %54 = vector.broadcast %cst_25 : f32 to vector<8x1xf32>
    %55 = arith.divf %53, %54 : vector<8x1xf32>
    %56 = arith.mulf %50, %50 : vector<8x1xf32>
    %57 = arith.subf %55, %56 : vector<8x1xf32>
    %cst_26 = arith.constant 0.000000e+00 : f32
    %58 = vector.broadcast %cst_26 : f32 to vector<8x1xf32>
    %59 = arith.maximumf %57, %58 : vector<8x1xf32>
    %cst_27 = arith.constant 9.99999974E-6 : f32
    %60 = vector.broadcast %cst_27 : f32 to vector<8x1xf32>
    %61 = arith.addf %59, %60 : vector<8x1xf32>
    %62 = math.rsqrt %61 : vector<8x1xf32>
    %63 = vector.broadcast %50 : vector<8x1xf32> to vector<8x128xf32>
    %64 = arith.subf %44, %63 : vector<8x128xf32>
    %65 = vector.broadcast %62 : vector<8x1xf32> to vector<8x128xf32>
    %66 = arith.mulf %64, %65 : vector<8x128xf32>
    %67 = vector.broadcast %45 : vector<1x128xf32> to vector<8x128xf32>
    %68 = arith.mulf %66, %67 : vector<8x128xf32>
    %69 = vector.broadcast %46 : vector<1x128xf32> to vector<8x128xf32>
    %70 = arith.addf %68, %69 : vector<8x128xf32>
    %cst_28 = arith.constant 5.000000e-01 : f32
    %71 = vector.broadcast %cst_28 : f32 to vector<8x128xf32>
    %72 = arith.mulf %71, %70 : vector<8x128xf32>
    %cst_29 = arith.constant 0.707106769 : f32
    %73 = vector.broadcast %cst_29 : f32 to vector<8x128xf32>
    %74 = arith.mulf %70, %73 : vector<8x128xf32>
    %75 = math.erf %74 : vector<8x128xf32>
    %cst_30 = arith.constant 1.000000e+00 : f32
    %76 = vector.broadcast %cst_30 : f32 to vector<8x128xf32>
    %77 = arith.addf %76, %75 : vector<8x128xf32>
    %78 = arith.mulf %72, %77 : vector<8x128xf32>
    %c0_31 = arith.constant 0 : index
    %c0_32 = arith.constant 0 : index
    %79 = vector.load %arg5[%c0_31, %c0_32] : memref<128x128xf32, #tpu.memory_space<vmem>>, vector<128x128xf32>
    %cst_33 = arith.constant dense<0.000000e+00> : vector<8x128xf32>
    %80 = tpu.matmul %78, %79, %cst_33 {dimension_numbers = #tpu.dot_dimension_numbers<[1], [0], [0], [1], [0, 0, 1, 1], [], []>} : vector<8x128xf32>, vector<128x128xf32>, vector<8x128xf32> -> vector<8x128xf32>
    %c6 = arith.constant 6 : index
    %c0_34 = arith.constant 0 : index
    %81 = vector.load %arg3[%c6, %c0_34] : memref<8x128xf32, #tpu.memory_space<vmem>>, vector<1x128xf32>
    %82 = vector.broadcast %81 : vector<1x128xf32> to vector<8x128xf32>
    %83 = arith.addf %80, %82 : vector<8x128xf32>
    %84 = tpu.iota {dimensions = array<i32: 1>} : vector<8x128xi32>
    %c8_i32 = arith.constant 8 : i32
    %85 = vector.broadcast %c8_i32 : i32 to vector<8x128xi32>
    %86 = arith.cmpi slt, %84, %85 : vector<8x128xi32>
    %cst_35 = arith.constant -2.000000e+01 : f32
    %cst_36 = arith.constant 2.000000e+00 : f32
    %87 = vector.broadcast %cst_35 : f32 to vector<8x128xf32>
    %88 = arith.maximumf %87, %83 : vector<8x128xf32>
    %89 = vector.broadcast %cst_36 : f32 to vector<8x128xf32>
    %90 = arith.minimumf %89, %88 : vector<8x128xf32>
    %91 = arith.select %86, %83, %90 : vector<8x128xi1>, vector<8x128xf32>
    %c0_37 = arith.constant 0 : index
    %c0_38 = arith.constant 0 : index
    %92 = vector.load %arg6[%c0_37, %c0_38] : memref<8x128xf32, #tpu.memory_space<vmem>>, vector<8x128xf32>
    tpu.vector_store %arg6[%c0_37, %c0_38], %91 {strides = array<i32>} : memref<8x128xf32, #tpu.memory_space<vmem>>, vector<8x128xf32>,
    return
  }
  func.func @transform_0(%arg0: i32) -> (i32, i32) {
    %c0_i32 = arith.constant 0 : i32
    %c0_i32_0 = arith.constant 0 : i32
    return %arg0, %c0_i32 : i32, i32
  }
  func.func @transform_1(%arg0: i32) -> (i32, i32) {
    %c0_i32 = arith.constant 0 : i32
    %c0_i32_0 = arith.constant 0 : i32
    %c0_i32_1 = arith.constant 0 : i32
    return %c0_i32, %c0_i32_0 : i32, i32
  }
  func.func @transform_2(%arg0: i32) -> (i32, i32) {
    %c0_i32 = arith.constant 0 : i32
    %c0_i32_0 = arith.constant 0 : i32
    %c0_i32_1 = arith.constant 0 : i32
    return %c0_i32, %c0_i32_0 : i32, i32
  }
  func.func @transform_3(%arg0: i32) -> (i32, i32) {
    %c0_i32 = arith.constant 0 : i32
    %c0_i32_0 = arith.constant 0 : i32
    %c0_i32_1 = arith.constant 0 : i32
    return %c0_i32, %c0_i32_0 : i32, i32
  }
  func.func @transform_4(%arg0: i32) -> (i32, i32) {
    %c0_i32 = arith.constant 0 : i32
    %c0_i32_0 = arith.constant 0 : i32
    %c0_i32_1 = arith.constant 0 : i32
    return %c0_i32, %c0_i32_0 : i32, i32
  }
  func.func @transform_5(%arg0: i32) -> (i32, i32) {
    %c0_i32 = arith.constant 0 : i32
    %c0_i32_0 = arith.constant 0 : i32
    return %arg0, %c0_i32 : i32, i32
  }
}

</mosaic_0001>

<llo_original>
// kernel: actor_forward.1
$region0: #{actor_forward.1}
  #allocation0 [shape = 'u32[]', space=smem, size = 0x4, offset = 0x4, fixed_abs, tag = 'smem constant byte address 0x4 - core index']
  #allocation1 [shape = 'u32[144,128]{1,0:T(1,128)}', space=vmem, size = 0x12000, scoped, tag = 'internal scratch']
  %s0 = inlined_call_operand.hbm [shape: f32[8,32], index: 0, kind: input, shape index: {}]
  %s1 = inlined_call_operand.hbm [shape: f32[32,128], index: 1, kind: input, shape index: {}]
  %s2 = inlined_call_operand.hbm [shape: f32[8,128], index: 2, kind: input, shape index: {}]
  %s3 = inlined_call_operand.hbm [shape: f32[128,128], index: 3, kind: input, shape index: {}]
  %s4 = inlined_call_operand.hbm [shape: f32[128,128], index: 4, kind: input, shape index: {}]
  %s5 = inlined_call_operand.vmem [shape: f32[8,128], index: 5, kind: output, shape index: {}]
  %s6 = sld [smem:[#allocation0]]
  $region50: #{actor_forward.1} parent=0
    _
  %s8 = ssub.s32 1, %s6
  %s9 = scalar_select 0, %s8, %s6
  $region1: #{actor_forward.1} parent=0
    #allocation2 [shape = 'u8[4096]{0}', space=vmem, size = 0x1000, scoped, tag = 'input window, operand 0, single buffered']
    #allocation3 [shape = 's32[1]{0}', space=sflag, size = 0x4, scoped, tag = 'scoped memory for actor_forward.1']
    #allocation4 [shape = 'u8[16384]{0}', space=vmem, size = 0x4000, scoped, tag = 'input window, operand 1, single buffered']
    #allocation5 [shape = 's32[1]{0}', space=sflag, size = 0x4, scoped, tag = 'scoped memory for actor_forward.1']
    #allocation6 [shape = 'u8[4096]{0}', space=vmem, size = 0x1000, scoped, tag = 'input window, operand 2, single buffered']
    #allocation7 [shape = 'u8[65536]{0}', space=vmem, size = 0x10000, scoped, tag = 'input window, operand 3, single buffered']
    #allocation8 [shape = 's32[1]{0}', space=sflag, size = 0x4, scoped, tag = 'scoped memory for actor_forward.1']
    #allocation9 [shape = 'u8[65536]{0}', space=vmem, size = 0x10000, scoped, tag = 'input window, operand 4, single buffered']
    %10 = vsyncpa [#allocation3], 0
    %11 = vsyncpa [#allocation5], 0
    %12 = vsyncpa [#allocation8], 0
    // Predicated region
    $region2: #{actor_forward.1} parent=1 // pred_check
      _
    $region3: #{actor_forward.1} parent=1 // pred_check_branch
      %14 = sbr.rel (0) target = $region5
    $region4: #{actor_forward.1} parent=1 // pred_region
      %s16 = ssub.s32 128, 128
      %17 = vsyncadd [#allocation3], %s16
      %s19 = sshll.u32 [#allocation2], 4
      %s20 = int_to_ptr.vmem [resolvable:$true] %s19
      %22 = dma.hbm_to_vmem [thread:$0]  %s0, 128, %s20, [#allocation3]
    $region5: #{actor_forward.1} parent=1 // pred_fallthru
      _
    // Predicated region
    $region6: #{actor_forward.1} parent=1 // pred_check
      _
    $region7: #{actor_forward.1} parent=1 // pred_check_branch
      %24 = sbr.rel (0) target = $region9
    $region8: #{actor_forward.1} parent=1 // pred_region
      %s26 = ssub.s32 512, 512
      %27 = vsyncadd [#allocation5], %s26
      %s28 = sshll.u32 [#allocation4], 4
      %s29 = int_to_ptr.vmem [resolvable:$true] %s28
      %34 = dma.hbm_to_vmem [thread:$0]  %s1, 512, %s29, [#allocation5], 128, 128, 8
    $region9: #{actor_forward.1} parent=1 // pred_fallthru
      _
    // Predicated region
    $region10: #{actor_forward.1} parent=1 // pred_check
      _
    $region11: #{actor_forward.1} parent=1 // pred_check_branch
      %36 = sbr.rel (0) target = $region13
    $region12: #{actor_forward.1} parent=1 // pred_region
      %s38 = ssub.s32 128, 128
      %39 = vsyncadd [#allocation5], %s38
      %s41 = sshll.u32 [#allocation6], 4
      %s42 = int_to_ptr.vmem [resolvable:$true] %s41
      %44 = dma.hbm_to_vmem [thread:$0]  %s2, 128, %s42, [#allocation5]
    $region13: #{actor_forward.1} parent=1 // pred_fallthru
      _
    // Predicated region
    $region14: #{actor_forward.1} parent=1 // pred_check
      _
    $region15: #{actor_forward.1} parent=1 // pred_check_branch
      %46 = sbr.rel (0) target = $region17
    $region16: #{actor_forward.1} parent=1 // pred_region
      %s48 = ssub.s32 2048, 2048
      %49 = vsyncadd [#allocation8], %s48
      %s50 = sshll.u32 [#allocation7], 4
      %s51 = int_to_ptr.vmem [resolvable:$true] %s50
      %56 = dma.hbm_to_vmem [thread:$0]  %s3, 2048, %s51, [#allocation8], 128, 128, 8
    $region17: #{actor_forward.1} parent=1 // pred_fallthru
      _
    // Predicated region
    $region18: #{actor_forward.1} parent=1 // pred_check
      _
    $region19: #{actor_forward.1} parent=1 // pred_check_branch
      %58 = sbr.rel (0) target = $region21
    $region20: #{actor_forward.1} parent=1 // pred_region
      %s60 = ssub.s32 2048, 2048
      %61 = vsyncadd [#allocation8], %s60
      %s62 = sshll.u32 [#allocation9], 4
      %s63 = int_to_ptr.vmem [resolvable:$true] %s62
      %68 = dma.hbm_to_vmem [thread:$0]  %s4, 2048, %s63, [#allocation8], 128, 128, 8
    $region21: #{actor_forward.1} parent=1 // pred_fallthru
      _
    // Predicated region
    $region22: #{actor_forward.1} parent=1 // pred_check
      _
    $region23: #{actor_forward.1} parent=1 // pred_check_branch
      %70 = sbr.rel (0) target = $region25
    $region24: #{actor_forward.1} parent=1 // pred_region
      %71 = dma.done [#allocation3], 128
    $region25: #{actor_forward.1} parent=1 // pred_fallthru
      _
    // Predicated region
    $region26: #{actor_forward.1} parent=1 // pred_check
      _
    $region27: #{actor_forward.1} parent=1 // pred_check_branch
      %73 = sbr.rel (0) target = $region29
    $region28: #{actor_forward.1} parent=1 // pred_region
      %74 = dma.done [#allocation5], 512
    $region29: #{actor_forward.1} parent=1 // pred_fallthru
      _
    // Predicated region
    $region30: #{actor_forward.1} parent=1 // pred_check
      _
    $region31: #{actor_forward.1} parent=1 // pred_check_branch
      %76 = sbr.rel (0) target = $region33
    $region32: #{actor_forward.1} parent=1 // pred_region
      %77 = dma.done [#allocation5], 128
    $region33: #{actor_forward.1} parent=1 // pred_fallthru
      _
    // Predicated region
    $region34: #{actor_forward.1} parent=1 // pred_check
      _
    $region35: #{actor_forward.1} parent=1 // pred_check_branch
      %79 = sbr.rel (0) target = $region37
    $region36: #{actor_forward.1} parent=1 // pred_region
      %80 = dma.done [#allocation8], 2048
    $region37: #{actor_forward.1} parent=1 // pred_fallthru
      _
    // Predicated region
    $region38: #{actor_forward.1} parent=1 // pred_check
      _
    $region39: #{actor_forward.1} parent=1 // pred_check_branch
      %82 = sbr.rel (0) target = $region41
    $region40: #{actor_forward.1} parent=1 // pred_region
      %83 = dma.done [#allocation8], 2048
    $region41: #{actor_forward.1} parent=1 // pred_fallthru
      _
    %v84 = vld [vmem:[#allocation2] sm:$0xff]
    %v85 = vld [vmem:[#allocation4] sm:$0xff]
    %v86 = vld [vmem:[#allocation4 + $0x8] sm:$0xff]
    %v87 = vld [vmem:[#allocation4 + $0x10] sm:$0xff]
    %v88 = vld [vmem:[#allocation4 + $0x18] sm:$0xff]
    %v89 = vld [vmem:[#allocation6] sm:$0x1]
    %v90 = vlaneseq
    %v91 = vshrl.u32 %v90, 7
    %v92 = vsub.s32 0, %v91
    %v93 = vrot.slane %v89, %v92
    %vm94 = vcmask 261120
    %v96 = vsel %vm94, %v84, 0
    %98 = vmatprep.subr.mxu0 0.0
    %99 = vmatpush1.msra.mxu0 0.0
    %100 = vmatprep.subr.mxu0 0.0
    %101 = vmatpush1.msra.mxu0 0.0
    %102 = vmatprep.subr.mxu0 0.0
    %103 = vmatpush1.msra.mxu0 0.0
    %104 = vmatprep.subr.mxu0 0.0
    %105 = vmatpush1.msra.mxu0 0.0
    %106 = vmatprep.subr.mxu0 0.0
    %107 = vmatpush1.msra.mxu0 0.0
    %108 = vmatprep.subr.mxu0 0.0
    %109 = vmatpush1.msra.mxu0 0.0
    %110 = vmatprep.subr.mxu0 0.0
    %111 = vmatpush1.msra.mxu0 0.0
    %112 = vmatprep.subr.mxu0 0.0
    %113 = vmatpush1.msra.mxu0 0.0
    %114 = vmatprep.subr.mxu0 0.0
    %115 = vmatpush1.msra.mxu0 0.0
    %116 = vmatprep.subr.mxu0 0.0
    %117 = vmatpush1.msra.mxu0 0.0
    %118 = vmatprep.subr.mxu0 0.0
    %119 = vmatpush1.msra.mxu0 0.0
    %120 = vmatprep.subr.mxu0 0.0
    %121 = vmatpush1.msra.mxu0 0.0
    %122 = vmatprep.subr.mxu0 0.0
    %123 = vmatpush1.msra.mxu0 %v88
    %124 = vmatprep.subr.mxu0 0.0
    %125 = vmatpush1.msra.mxu0 %v87
    %126 = vmatprep.subr.mxu0 0.0
    %127 = vmatpush1.msra.mxu0 %v86
    %128 = vmatprep.subr.mxu0 0.0
    %129 = vmatpush1.msra.mxu0 %v85
    %130 = vmatprep.subr.mxu0 0.0
    %131 = vmatpush2.msra.mxu0 0.0
    %132 = vmatprep.subr.mxu0 0.0
    %133 = vmatpush2.msra.mxu0 0.0
    %134 = vmatprep.subr.mxu0 0.0
    %135 = vmatpush2.msra.mxu0 0.0
    %136 = vmatprep.subr.mxu0 0.0
    %137 = vmatpush2.msra.mxu0 0.0
    %138 = vmatprep.subr.mxu0 0.0
    %139 = vmatpush2.msra.mxu0 0.0
    %140 = vmatprep.subr.mxu0 0.0
    %141 = vmatpush2.msra.mxu0 0.0
    %142 = vmatprep.subr.mxu0 0.0
    %143 = vmatpush2.msra.mxu0 0.0
    %144 = vmatprep.subr.mxu0 0.0
    %145 = vmatpush2.msra.mxu0 0.0
    %146 = vmatprep.subr.mxu0 0.0
    %147 = vmatpush2.msra.mxu0 0.0
    %148 = vmatprep.subr.mxu0 0.0
    %149 = vmatpush2.msra.mxu0 0.0
    %150 = vmatprep.subr.mxu0 0.0
    %151 = vmatpush2.msra.mxu0 0.0
    %152 = vmatprep.subr.mxu0 0.0
    %153 = vmatpush2.msra.mxu0 0.0
    %154 = vmatprep.subr.mxu0 0.0
    %155 = vmatpush2.msra.mxu0 0.0
    %156 = vmatprep.subr.mxu0 0.0
    %157 = vmatpush2.msra.mxu0 0.0
    %158 = vmatprep.subr.mxu0 0.0
    %159 = vmatpush2.msra.mxu0 0.0
    %160 = vmatprep.subr.mxu0 0.0
    %161 = vmatpush2.msra.mxu0 0.0
    %162 = vmatprep.mubr.f32.mxu0 0.0
    %163 = vmatmul.mubr.f32.gmra.mxu0 %v96
    %v164 = vpop.f32.mrf.mxu0
    %v165 = vadd.f32 %v93, %v164
    %v166 = vpop.f32.mrf.mxu0
    %167 = vdwg.mxu0
    %v168 = vld [vmem:[#allocation6 + $0x1] sm:$0x1]
    %v169 = vld [vmem:[#allocation6 + $0x2] sm:$0x1]
    %170 = vadd.xlane.f32.xlu0 %v165
    %v171 = vpop.xlane.xlu0 %170
    %v172 = vrcp.pop 128.0
    %v173 = vmul.f32 %v171, %v172
    %v174 = vmul.f32 %v165, %v165
    %175 = vadd.xlane.f32.xlu0 %v174
    %v176 = vpop.xlane.xlu0 %175
    %v177 = vmul.f32 %v176, %v172
    %v178 = vmul.f32 %v173, %v173
    %v179 = vsub.f32 %v177, %v178
    %v180 = vmax.f32 %v179, 0.0
    %v181 = vadd.f32 %v180, 1e-05
    %v182 = vrsqrt.pop %v181
    %v183 = vsub.f32 %v165, %v173
    %v184 = vmul.f32 %v183, %v182
    %v185 = vlaneseq
    %v186 = vshrl.u32 %v185, 7
    %v187 = vsub.s32 0, %v186
    %v188 = vrot.slane %v168, %v187
    %v189 = vmul.f32 %v184, %v188
    %v190 = vlaneseq
    %v191 = vshrl.u32 %v190, 7
    %v192 = vsub.s32 0, %v191
    %v193 = vrot.slane %v169, %v192
    %v194 = vadd.f32 %v189, %v193
    %v195 = vmul.f32 %v194, 0.5
    %v196 = vmul.f32 %v194, 0.70710677
    %v197 = verf.f32.pop %v196
    %v198 = vadd.f32 %v197, 1.0
    %v199 = vmul.f32 %v195, %v198
    %v200 = vld [vmem:[#allocation7] sm:$0xff]
    %v201 = vld [vmem:[#allocation7 + $0x8] sm:$0xff]
    %v202 = vld [vmem:[#allocation7 + $0x10] sm:$0xff]
    %v203 = vld [vmem:[#allocation7 + $0x18] sm:$0xff]
    %v204 = vld [vmem:[#allocation7 + $0x20] sm:$0xff]
    %v205 = vld [vmem:[#allocation7 + $0x28] sm:$0xff]
    %v206 = vld [vmem:[#allocation7 + $0x30] sm:$0xff]
    %v207 = vld [vmem:[#allocation7 + $0x38] sm:$0xff]
    %v208 = vld [vmem:[#allocation7 + $0x40] sm:$0xff]
    %v209 = vld [vmem:[#allocation7 + $0x48] sm:$0xff]
    %v210 = vld [vmem:[#allocation7 + $0x50] sm:$0xff]
    %v211 = vld [vmem:[#allocation7 + $0x58] sm:$0xff]
    %v212 = vld [vmem:[#allocation7 + $0x60] sm:$0xff]
    %v213 = vld [vmem:[#allocation7 + $0x68] sm:$0xff]
    %v214 = vld [vmem:[#allocation7 + $0x70] sm:$0xff]
    %v215 = vld [vmem:[#allocation7 + $0x78] sm:$0xff]
    %v216 = vld [vmem:[#allocation6 + $0x3] sm:$0x1]
    %v217 = vlaneseq
    %v218 = vshrl.u32 %v217, 7
    %v219 = vsub.s32 0, %v218
    %v220 = vrot.slane %v216, %v219
    %221 = vmatprep.subr.mxu0 0.0
    %222 = vmatpush1.msra.mxu0 %v215
    %223 = vmatprep.subr.mxu0 0.0
    %224 = vmatpush1.msra.mxu0 %v214
    %225 = vmatprep.subr.mxu0 0.0
    %226 = vmatpush1.msra.mxu0 %v213
    %227 = vmatprep.subr.mxu0 0.0
    %228 = vmatpush1.msra.mxu0 %v212
    %229 = vmatprep.subr.mxu0 0.0
    %230 = vmatpush1.msra.mxu0 %v211
    %231 = vmatprep.subr.mxu0 0.0
    %232 = vmatpush1.msra.mxu0 %v210
    %233 = vmatprep.subr.mxu0 0.0
    %234 = vmatpush1.msra.mxu0 %v209
    %235 = vmatprep.subr.mxu0 0.0
    %236 = vmatpush1.msra.mxu0 %v208
    %237 = vmatprep.subr.mxu0 0.0
    %238 = vmatpush1.msra.mxu0 %v207
    %239 = vmatprep.subr.mxu0 0.0
    %240 = vmatpush1.msra.mxu0 %v206
    %241 = vmatprep.subr.mxu0 0.0
    %242 = vmatpush1.msra.mxu0 %v205
    %243 = vmatprep.subr.mxu0 0.0
    %244 = vmatpush1.msra.mxu0 %v204
    %245 = vmatprep.subr.mxu0 0.0
    %246 = vmatpush1.msra.mxu0 %v203
    %247 = vmatprep.subr.mxu0 0.0
    %248 = vmatpush1.msra.mxu0 %v202
    %249 = vmatprep.subr.mxu0 0.0
    %250 = vmatpush1.msra.mxu0 %v201
    %251 = vmatprep.subr.mxu0 0.0
    %252 = vmatpush1.msra.mxu0 %v200
    %253 = vmatprep.subr.mxu0 0.0
    %254 = vmatpush2.msra.mxu0 0.0
    %255 = vmatprep.subr.mxu0 0.0
    %256 = vmatpush2.msra.mxu0 0.0
    %257 = vmatprep.subr.mxu0 0.0
    %258 = vmatpush2.msra.mxu0 0.0
    %259 = vmatprep.subr.mxu0 0.0
    %260 = vmatpush2.msra.mxu0 0.0
    %261 = vmatprep.subr.mxu0 0.0
    %262 = vmatpush2.msra.mxu0 0.0
    %263 = vmatprep.subr.mxu0 0.0
    %264 = vmatpush2.msra.mxu0 0.0
    %265 = vmatprep.subr.mxu0 0.0
    %266 = vmatpush2.msra.mxu0 0.0
    %267 = vmatprep.subr.mxu0 0.0
    %268 = vmatpush2.msra.mxu0 0.0
    %269 = vmatprep.subr.mxu0 0.0
    %270 = vmatpush2.msra.mxu0 0.0
    %271 = vmatprep.subr.mxu0 0.0
    %272 = vmatpush2.msra.mxu0 0.0
    %273 = vmatprep.subr.mxu0 0.0
    %274 = vmatpush2.msra.mxu0 0.0
    %275 = vmatprep.subr.mxu0 0.0
    %276 = vmatpush2.msra.mxu0 0.0
    %277 = vmatprep.subr.mxu0 0.0
    %278 = vmatpush2.msra.mxu0 0.0
    %279 = vmatprep.subr.mxu0 0.0
    %280 = vmatpush2.msra.mxu0 0.0
    %281 = vmatprep.subr.mxu0 0.0
    %282 = vmatpush2.msra.mxu0 0.0
    %283 = vmatprep.subr.mxu0 0.0
    %284 = vmatpush2.msra.mxu0 0.0
    %285 = vmatprep.mubr.f32.mxu0 0.0
    %286 = vmatmul.mubr.f32.gmra.mxu0 %v199
    %v287 = vpop.f32.mrf.mxu0
    %v288 = vadd.f32 %v220, %v287
    %v289 = vpop.f32.mrf.mxu0
    %290 = vdwg.mxu0
    %v291 = vld [vmem:[#allocation6 + $0x4] sm:$0x1]
    %v292 = vld [vmem:[#allocation6 + $0x5] sm:$0x1]
    %293 = vadd.xlane.f32.xlu0 %v288
    %v294 = vpop.xlane.xlu0 %293
    %v295 = vmul.f32 %v294, %v172
    %v296 = vmul.f32 %v288, %v288
    %297 = vadd.xlane.f32.xlu0 %v296
    %v298 = vpop.xlane.xlu0 %297
    %v299 = vmul.f32 %v298, %v172
    %v300 = vmul.f32 %v295, %v295
    %v301 = vsub.f32 %v299, %v300
    %v302 = vmax.f32 %v301, 0.0
    %v303 = vadd.f32 %v302, 1e-05
    %v304 = vrsqrt.pop %v303
    %v305 = vsub.f32 %v288, %v295
    %v306 = vmul.f32 %v305, %v304
    %v307 = vlaneseq
    %v308 = vshrl.u32 %v307, 7
    %v309 = vsub.s32 0, %v308
    %v310 = vrot.slane %v291, %v309
    %v311 = vmul.f32 %v306, %v310
    %v312 = vlaneseq
    %v313 = vshrl.u32 %v312, 7
    %v314 = vsub.s32 0, %v313
    %v315 = vrot.slane %v292, %v314
    %v316 = vadd.f32 %v311, %v315
    %v317 = vmul.f32 %v316, 0.5
    %v318 = vmul.f32 %v316, 0.70710677
    %v319 = verf.f32.pop %v318
    %v320 = vadd.f32 %v319, 1.0
    %v321 = vmul.f32 %v317, %v320
    %v322 = vld [vmem:[#allocation9] sm:$0xff]
    %v323 = vld [vmem:[#allocation9 + $0x8] sm:$0xff]
    %v324 = vld [vmem:[#allocation9 + $0x10] sm:$0xff]
    %v325 = vld [vmem:[#allocation9 + $0x18] sm:$0xff]
    %v326 = vld [vmem:[#allocation9 + $0x20] sm:$0xff]
    %v327 = vld [vmem:[#allocation9 + $0x28] sm:$0xff]
    %v328 = vld [vmem:[#allocation9 + $0x30] sm:$0xff]
    %v329 = vld [vmem:[#allocation9 + $0x38] sm:$0xff]
    %v330 = vld [vmem:[#allocation9 + $0x40] sm:$0xff]
    %v331 = vld [vmem:[#allocation9 + $0x48] sm:$0xff]
    %v332 = vld [vmem:[#allocation9 + $0x50] sm:$0xff]
    %v333 = vld [vmem:[#allocation9 + $0x58] sm:$0xff]
    %v334 = vld [vmem:[#allocation9 + $0x60] sm:$0xff]
    %v335 = vld [vmem:[#allocation9 + $0x68] sm:$0xff]
    %v336 = vld [vmem:[#allocation9 + $0x70] sm:$0xff]
    %v337 = vld [vmem:[#allocation9 + $0x78] sm:$0xff]
    %v338 = vld [vmem:[#allocation6 + $0x6] sm:$0x1]
    %v339 = vlaneseq
    %v340 = vshrl.u32 %v339, 7
    %v341 = vsub.s32 0, %v340
    %v342 = vrot.slane %v338, %v341
    %343 = vmatprep.subr.mxu0 0.0
    %344 = vmatpush1.msra.mxu0 %v337
    %345 = vmatprep.subr.mxu0 0.0
    %346 = vmatpush1.msra.mxu0 %v336
    %347 = vmatprep.subr.mxu0 0.0
    %348 = vmatpush1.msra.mxu0 %v335
    %349 = vmatprep.subr.mxu0 0.0
    %350 = vmatpush1.msra.mxu0 %v334
    %351 = vmatprep.subr.mxu0 0.0
    %352 = vmatpush1.msra.mxu0 %v333
    %353 = vmatprep.subr.mxu0 0.0
    %354 = vmatpush1.msra.mxu0 %v332
    %355 = vmatprep.subr.mxu0 0.0
    %356 = vmatpush1.msra.mxu0 %v331
    %357 = vmatprep.subr.mxu0 0.0
    %358 = vmatpush1.msra.mxu0 %v330
    %359 = vmatprep.subr.mxu0 0.0
    %360 = vmatpush1.msra.mxu0 %v329
    %361 = vmatprep.subr.mxu0 0.0
    %362 = vmatpush1.msra.mxu0 %v328
    %363 = vmatprep.subr.mxu0 0.0
    %364 = vmatpush1.msra.mxu0 %v327
    %365 = vmatprep.subr.mxu0 0.0
    %366 = vmatpush1.msra.mxu0 %v326
    %367 = vmatprep.subr.mxu0 0.0
    %368 = vmatpush1.msra.mxu0 %v325
    %369 = vmatprep.subr.mxu0 0.0
    %370 = vmatpush1.msra.mxu0 %v324
    %371 = vmatprep.subr.mxu0 0.0
    %372 = vmatpush1.msra.mxu0 %v323
    %373 = vmatprep.subr.mxu0 0.0
    %374 = vmatpush1.msra.mxu0 %v322
    %375 = vmatprep.subr.mxu0 0.0
    %376 = vmatpush2.msra.mxu0 0.0
    %377 = vmatprep.subr.mxu0 0.0
    %378 = vmatpush2.msra.mxu0 0.0
    %379 = vmatprep.subr.mxu0 0.0
    %380 = vmatpush2.msra.mxu0 0.0
    %381 = vmatprep.subr.mxu0 0.0
    %382 = vmatpush2.msra.mxu0 0.0
    %383 = vmatprep.subr.mxu0 0.0
    %384 = vmatpush2.msra.mxu0 0.0
    %385 = vmatprep.subr.mxu0 0.0
    %386 = vmatpush2.msra.mxu0 0.0
    %387 = vmatprep.subr.mxu0 0.0
    %388 = vmatpush2.msra.mxu0 0.0
    %389 = vmatprep.subr.mxu0 0.0
    %390 = vmatpush2.msra.mxu0 0.0
    %391 = vmatprep.subr.mxu0 0.0
    %392 = vmatpush2.msra.mxu0 0.0
    %393 = vmatprep.subr.mxu0 0.0
    %394 = vmatpush2.msra.mxu0 0.0
    %395 = vmatprep.subr.mxu0 0.0
    %396 = vmatpush2.msra.mxu0 0.0
    %397 = vmatprep.subr.mxu0 0.0
    %398 = vmatpush2.msra.mxu0 0.0
    %399 = vmatprep.subr.mxu0 0.0
    %400 = vmatpush2.msra.mxu0 0.0
    %401 = vmatprep.subr.mxu0 0.0
    %402 = vmatpush2.msra.mxu0 0.0
    %403 = vmatprep.subr.mxu0 0.0
    %404 = vmatpush2.msra.mxu0 0.0
    %405 = vmatprep.subr.mxu0 0.0
    %406 = vmatpush2.msra.mxu0 0.0
    %407 = vmatprep.mubr.f32.mxu0 0.0
    %408 = vmatmul.mubr.f32.gmra.mxu0 %v321
    %v409 = vpop.f32.mrf.mxu0
    %v410 = vadd.f32 %v342, %v409
    %v411 = vpop.f32.mrf.mxu0
    %412 = vdwg.mxu0
    %v413 = vlaneseq
    %v414 = vand.u32 %v413, 127
    %vm415 = vcmp.lt.s32.totalorder %v414, 8
    %v416 = vmax.f32 %v410, -20.0
    %v417 = vmin.f32 %v416, 2.0
    %v418 = vsel %vm415, %v410, %v417
    %419 = vst [vmem:[%s5] sm:$0xff] %v418
    // Predicated region
    $region42: #{actor_forward.1} parent=1 // pred_check
      _
    $region43: #{actor_forward.1} parent=1 // pred_check_branch
      %421 = sbr.rel (0) target = $region45
    $region44: #{actor_forward.1} parent=1 // pred_region
      _
    $region45: #{actor_forward.1} parent=1 // pred_fallthru
      _
    // Predicated region
    $region46: #{actor_forward.1} parent=1 // pred_check
      _
    $region47: #{actor_forward.1} parent=1 // pred_check_branch
      %423 = sbr.rel (0) target = $region49
    $region48: #{actor_forward.1} parent=1 // pred_region
      _
    $region49: #{actor_forward.1} parent=1 // pred_fallthru
      _
    %424 = vsyncpa [#allocation3], 1
    %425 = vsyncpa [#allocation5], 1
    %426 = vsyncpa [#allocation8], 1

</llo_original>
